<compile_context>
chip_gen: v7x
topology: tpu7x:2x2x1
jax: 0.10.0
libtpu: 0.0.40
codegen_flags: <defaults>
</compile_context>

<pallas_src>
import jax
import jax.numpy as jnp
from jax.experimental import pallas as pl
from jax.experimental.pallas import tpu as pltpu

NUM_CLASSES = 8
IN_FEATURES = 21 * 3 * 2                      # 126
LAYER_DIMS = [IN_FEATURES, 80, 64, 32, 20, 10, NUM_CLASSES]
NUM_LAYERS = len(LAYER_DIMS) - 1              # 6
PAD = 128                                     # lane width; every layer dim <= 128
BIAS_ROWS = 8                                 # sublane-aligned bias slab (rows 0..5 used)


def _round_up(x, m):
    return (x + m - 1) // m * m


def simple_nn4_kernel(x_ref, w_ref, b_ref, out_ref):
    """Fused 6-layer MLP forward on one (B_TILE, 128) batch tile.

    x_ref:   (B_TILE, 128)      zero-padded input features
    w_ref:   (6, 128, 128)      zero-padded weights, layout (in, out)
    b_ref:   (8, 128)           zero-padded biases (row i = layer i)
    out_ref: (B_TILE, 128)      lane-dense output; real logits in cols 0..7
    """
    h = x_ref[...]
    b_all = b_ref[...]                               # 4 KiB, loaded once
    for layer in range(NUM_LAYERS):                  # static unroll: 6 MXU matmuls
        h = jnp.dot(h, w_ref[layer], preferred_element_type=jnp.float32)
        h = h + b_all[layer:layer + 1, :]            # (1,128) row broadcast
        if layer < NUM_LAYERS - 1:
            h = jnp.maximum(h, 0.0)                  # ReLU; dropouts = identity (eval)
    out_ref[...] = h.astype(out_ref.dtype)


def simple_nn4_forward(x, w_slab, b_slab, *, b_tile=None):
    """x: (B, 126) f32.  w_slab: (6,128,128) f32.  b_slab: (8,128) f32."""
    B = x.shape[0]
    if b_tile is None:
        # Tall M tiles for big batches; don't over-pad tiny batches.
        b_tile = min(512, _round_up(max(B, 1), 8))
    B_pad = _round_up(B, b_tile)

    # Zero-pad batch + feature dims to a lane-aligned slab.
    x_pad = jnp.zeros((B_pad, PAD), jnp.float32).at[:B, :IN_FEATURES].set(x)

    grid = (B_pad // b_tile,)
    flops = 2 * B_pad * NUM_LAYERS * PAD * PAD
    bytes_accessed = 4 * (2 * B_pad * PAD + NUM_LAYERS * PAD * PAD + BIAS_ROWS * PAD)

    out = pl.pallas_call(
        simple_nn4_kernel,
        out_shape=jax.ShapeDtypeStruct((B_pad, PAD), jnp.float32),
        grid=grid,
        in_specs=[
            pl.BlockSpec((b_tile, PAD), lambda i: (i, 0)),            # x: batch-tiled
            pl.BlockSpec((NUM_LAYERS, PAD, PAD), lambda i: (0, 0, 0)),  # weights: resident
            pl.BlockSpec((BIAS_ROWS, PAD), lambda i: (0, 0)),         # biases: resident
        ],
        out_specs=pl.BlockSpec((b_tile, PAD), lambda i: (i, 0)),
        compiler_params=pltpu.CompilerParams(
            dimension_semantics=("parallel",)),                       # megacore on v7x
        cost_estimate=pl.CostEstimate(
            flops=flops, transcendentals=0, bytes_accessed=bytes_accessed),
    )(x_pad, w_slab, b_slab)

    return out[:B, :NUM_CLASSES]


def init_params(key):
    """PyTorch-default Linear init: U(-1/sqrt(fan_in), 1/sqrt(fan_in))."""
    params = []
    for i in range(NUM_LAYERS):
        fan_in, fan_out = LAYER_DIMS[i], LAYER_DIMS[i + 1]
        key, kw, kb = jax.random.split(key, 3)
        bound = 1.0 / jnp.sqrt(float(fan_in))
        w = jax.random.uniform(kw, (fan_in, fan_out), jnp.float32, -bound, bound)
        b = jax.random.uniform(kb, (fan_out,), jnp.float32, -bound, bound)
        params.append((w, b))
    return params


def pack_params(params):
    """Pack per-layer (W, b) into two zero-padded, lane-aligned slabs."""
    w_slab = jnp.zeros((NUM_LAYERS, PAD, PAD), jnp.float32)
    b_slab = jnp.zeros((BIAS_ROWS, PAD), jnp.float32)
    for i, (w, b) in enumerate(params):
        w_slab = w_slab.at[i, : w.shape[0], : w.shape[1]].set(w)
        b_slab = b_slab.at[i, : b.shape[0]].set(b)
    return w_slab, b_slab


def reference_forward(x, params):
    h = x
    for i, (w, b) in enumerate(params):
        h = h @ w + b
        if i < len(params) - 1:
            h = jnp.maximum(h, 0.0)
    return h


if __name__ == "__main__":
    key = jax.random.PRNGKey(0)
    key, kx = jax.random.split(key)

    B = 8  # small demo batch
    x = jax.random.normal(kx, (B, IN_FEATURES), jnp.float32)
    params = init_params(key)
    w_slab, b_slab = pack_params(params)

    out = simple_nn4_forward(x, w_slab, b_slab)
    out = jax.block_until_ready(out)

    ref = reference_forward(x, params)
    assert out.shape == (B, NUM_CLASSES)
    assert jnp.allclose(out, ref, atol=1e-4, rtol=1e-4), "mismatch vs JAX reference"

    # Also exercise the gridded path (batch > one tile) for pipeline coverage.
    key, kx2 = jax.random.split(key)
    B2 = 1024
    x2 = jax.random.normal(kx2, (B2, IN_FEATURES), jnp.float32)
    out2 = jax.block_until_ready(simple_nn4_forward(x2, w_slab, b_slab, b_tile=256))
    ref2 = reference_forward(x2, params)
    assert out2.shape == (B2, NUM_CLASSES)
    assert jnp.allclose(out2, ref2, atol=1e-4, rtol=1e-4), "mismatch (gridded path)"

    print("KERNEL_OK")
</pallas_src>

<mosaic_0001>
module attributes {stable_mosaic.version = 11 : i64} {
  func.func @simple_nn4_kernel(%arg0: i32, %arg1: memref<8x128xf32, #tpu.memory_space<vmem>>, %arg2: memref<6x128x128xf32, #tpu.memory_space<vmem>>, %arg3: memref<8x128xf32, #tpu.memory_space<vmem>>, %arg4: memref<8x128xf32, #tpu.memory_space<vmem>>) attributes {dimension_semantics = [#tpu.dimension_semantics<parallel>], iteration_bounds = array<i64: 1>, scalar_prefetch = 0 : i64, scratch_operands = 0 : i64, tpu.core_type = #tpu.core_type<tc>, window_params = [{transform_indices = @transform_0, window_bounds = array<i64: 8, 128>}, {pipeline_mode = #tpu.pipeline_mode<synchronous>, transform_indices = @transform_1, window_bounds = array<i64: 6, 128, 128>}, {pipeline_mode = #tpu.pipeline_mode<synchronous>, transform_indices = @transform_2, window_bounds = array<i64: 8, 128>}, {transform_indices = @transform_3, window_bounds = array<i64: 8, 128>}]} {
    %c0 = arith.constant 0 : index
    %c0_0 = arith.constant 0 : index
    %0 = vector.load %arg1[%c0, %c0_0] : memref<8x128xf32, #tpu.memory_space<vmem>>, vector<8x128xf32>
    %c0_1 = arith.constant 0 : index
    %c0_2 = arith.constant 0 : index
    %1 = vector.load %arg3[%c0_1, %c0_2] : memref<8x128xf32, #tpu.memory_space<vmem>>, vector<8x128xf32>
    %c0_3 = arith.constant 0 : index
    %c0_4 = arith.constant 0 : index
    %c0_5 = arith.constant 0 : index
    %2 = vector.load %arg2[%c0_3, %c0_4, %c0_5] : memref<6x128x128xf32, #tpu.memory_space<vmem>>, vector<1x128x128xf32>
    %3 = vector.shape_cast %2 : vector<1x128x128xf32> to vector<128x128xf32>
    %cst = arith.constant dense<0.000000e+00> : vector<8x128xf32>
    %4 = tpu.matmul %0, %3, %cst {dimension_numbers = #tpu.dot_dimension_numbers<[1], [0], [0], [1], [0, 0, 1, 1], [], []>} : vector<8x128xf32>, vector<128x128xf32>, vector<8x128xf32> -> vector<8x128xf32>
    %5 = vector.extract_strided_slice %1 {offsets = [0, 0], sizes = [1, 128], strides = [1, 1]} : vector<8x128xf32> to vector<1x128xf32>
    %6 = vector.broadcast %5 : vector<1x128xf32> to vector<8x128xf32>
    %7 = arith.addf %4, %6 : vector<8x128xf32>
    %cst_6 = arith.constant 0.000000e+00 : f32
    %8 = vector.broadcast %cst_6 : f32 to vector<8x128xf32>
    %9 = arith.maximumf %7, %8 : vector<8x128xf32>
    %c1 = arith.constant 1 : index
    %c0_7 = arith.constant 0 : index
    %c0_8 = arith.constant 0 : index
    %10 = vector.load %arg2[%c1, %c0_7, %c0_8] : memref<6x128x128xf32, #tpu.memory_space<vmem>>, vector<1x128x128xf32>
    %11 = vector.shape_cast %10 : vector<1x128x128xf32> to vector<128x128xf32>
    %cst_9 = arith.constant dense<0.000000e+00> : vector<8x128xf32>
    %12 = tpu.matmul %9, %11, %cst_9 {dimension_numbers = #tpu.dot_dimension_numbers<[1], [0], [0], [1], [0, 0, 1, 1], [], []>} : vector<8x128xf32>, vector<128x128xf32>, vector<8x128xf32> -> vector<8x128xf32>
    %13 = vector.extract_strided_slice %1 {offsets = [1, 0], sizes = [1, 128], strides = [1, 1]} : vector<8x128xf32> to vector<1x128xf32>
    %14 = vector.broadcast %13 : vector<1x128xf32> to vector<8x128xf32>
    %15 = arith.addf %12, %14 : vector<8x128xf32>
    %cst_10 = arith.constant 0.000000e+00 : f32
    %16 = vector.broadcast %cst_10 : f32 to vector<8x128xf32>
    %17 = arith.maximumf %15, %16 : vector<8x128xf32>
    %c2 = arith.constant 2 : index
    %c0_11 = arith.constant 0 : index
    %c0_12 = arith.constant 0 : index
    %18 = vector.load %arg2[%c2, %c0_11, %c0_12] : memref<6x128x128xf32, #tpu.memory_space<vmem>>, vector<1x128x128xf32>
    %19 = vector.shape_cast %18 : vector<1x128x128xf32> to vector<128x128xf32>
    %cst_13 = arith.constant dense<0.000000e+00> : vector<8x128xf32>
    %20 = tpu.matmul %17, %19, %cst_13 {dimension_numbers = #tpu.dot_dimension_numbers<[1], [0], [0], [1], [0, 0, 1, 1], [], []>} : vector<8x128xf32>, vector<128x128xf32>, vector<8x128xf32> -> vector<8x128xf32>
    %21 = vector.extract_strided_slice %1 {offsets = [2, 0], sizes = [1, 128], strides = [1, 1]} : vector<8x128xf32> to vector<1x128xf32>
    %22 = vector.broadcast %21 : vector<1x128xf32> to vector<8x128xf32>
    %23 = arith.addf %20, %22 : vector<8x128xf32>
    %cst_14 = arith.constant 0.000000e+00 : f32
    %24 = vector.broadcast %cst_14 : f32 to vector<8x128xf32>
    %25 = arith.maximumf %23, %24 : vector<8x128xf32>
    %c3 = arith.constant 3 : index
    %c0_15 = arith.constant 0 : index
    %c0_16 = arith.constant 0 : index
    %26 = vector.load %arg2[%c3, %c0_15, %c0_16] : memref<6x128x128xf32, #tpu.memory_space<vmem>>, vector<1x128x128xf32>
    %27 = vector.shape_cast %26 : vector<1x128x128xf32> to vector<128x128xf32>
    %cst_17 = arith.constant dense<0.000000e+00> : vector<8x128xf32>
    %28 = tpu.matmul %25, %27, %cst_17 {dimension_numbers = #tpu.dot_dimension_numbers<[1], [0], [0], [1], [0, 0, 1, 1], [], []>} : vector<8x128xf32>, vector<128x128xf32>, vector<8x128xf32> -> vector<8x128xf32>
    %29 = vector.extract_strided_slice %1 {offsets = [3, 0], sizes = [1, 128], strides = [1, 1]} : vector<8x128xf32> to vector<1x128xf32>
    %30 = vector.broadcast %29 : vector<1x128xf32> to vector<8x128xf32>
    %31 = arith.addf %28, %30 : vector<8x128xf32>
    %cst_18 = arith.constant 0.000000e+00 : f32
    %32 = vector.broadcast %cst_18 : f32 to vector<8x128xf32>
    %33 = arith.maximumf %31, %32 : vector<8x128xf32>
    %c4 = arith.constant 4 : index
    %c0_19 = arith.constant 0 : index
    %c0_20 = arith.constant 0 : index
    %34 = vector.load %arg2[%c4, %c0_19, %c0_20] : memref<6x128x128xf32, #tpu.memory_space<vmem>>, vector<1x128x128xf32>
    %35 = vector.shape_cast %34 : vector<1x128x128xf32> to vector<128x128xf32>
    %cst_21 = arith.constant dense<0.000000e+00> : vector<8x128xf32>
    %36 = tpu.matmul %33, %35, %cst_21 {dimension_numbers = #tpu.dot_dimension_numbers<[1], [0], [0], [1], [0, 0, 1, 1], [], []>} : vector<8x128xf32>, vector<128x128xf32>, vector<8x128xf32> -> vector<8x128xf32>
    %37 = vector.extract_strided_slice %1 {offsets = [4, 0], sizes = [1, 128], strides = [1, 1]} : vector<8x128xf32> to vector<1x128xf32>
    %38 = vector.broadcast %37 : vector<1x128xf32> to vector<8x128xf32>
    %39 = arith.addf %36, %38 : vector<8x128xf32>
    %cst_22 = arith.constant 0.000000e+00 : f32
    %40 = vector.broadcast %cst_22 : f32 to vector<8x128xf32>
    %41 = arith.maximumf %39, %40 : vector<8x128xf32>
    %c5 = arith.constant 5 : index
    %c0_23 = arith.constant 0 : index
    %c0_24 = arith.constant 0 : index
    %42 = vector.load %arg2[%c5, %c0_23, %c0_24] : memref<6x128x128xf32, #tpu.memory_space<vmem>>, vector<1x128x128xf32>
    %43 = vector.shape_cast %42 : vector<1x128x128xf32> to vector<128x128xf32>
    %cst_25 = arith.constant dense<0.000000e+00> : vector<8x128xf32>
    %44 = tpu.matmul %41, %43, %cst_25 {dimension_numbers = #tpu.dot_dimension_numbers<[1], [0], [0], [1], [0, 0, 1, 1], [], []>} : vector<8x128xf32>, vector<128x128xf32>, vector<8x128xf32> -> vector<8x128xf32>
    %45 = vector.extract_strided_slice %1 {offsets = [5, 0], sizes = [1, 128], strides = [1, 1]} : vector<8x128xf32> to vector<1x128xf32>
    %46 = vector.broadcast %45 : vector<1x128xf32> to vector<8x128xf32>
    %47 = arith.addf %44, %46 : vector<8x128xf32>
    %c0_26 = arith.constant 0 : index
    %c0_27 = arith.constant 0 : index
    %48 = vector.load %arg4[%c0_26, %c0_27] : memref<8x128xf32, #tpu.memory_space<vmem>>, vector<8x128xf32>
    tpu.vector_store %arg4[%c0_26, %c0_27], %47 {strides = array<i32>} : memref<8x128xf32, #tpu.memory_space<vmem>>, vector<8x128xf32>,
    return
  }
  func.func @transform_0(%arg0: i32) -> (i32, i32) {
    %c0_i32 = arith.constant 0 : i32
    %c0_i32_0 = arith.constant 0 : i32
    return %arg0, %c0_i32 : i32, i32
  }
  func.func @transform_1(%arg0: i32) -> (i32, i32, i32) {
    %c0_i32 = arith.constant 0 : i32
    %c0_i32_0 = arith.constant 0 : i32
    %c0_i32_1 = arith.constant 0 : i32
    %c0_i32_2 = arith.constant 0 : i32
    return %c0_i32, %c0_i32_0, %c0_i32_1 : i32, i32, i32
  }
  func.func @transform_2(%arg0: i32) -> (i32, i32) {
    %c0_i32 = arith.constant 0 : i32
    %c0_i32_0 = arith.constant 0 : i32
    %c0_i32_1 = arith.constant 0 : i32
    return %c0_i32, %c0_i32_0 : i32, i32
  }
  func.func @transform_3(%arg0: i32) -> (i32, i32) {
    %c0_i32 = arith.constant 0 : i32
    %c0_i32_0 = arith.constant 0 : i32
    return %arg0, %c0_i32 : i32, i32
  }
}

</mosaic_0001>

<llo_original>
// kernel: tpu_custom_call.1
$region0: #{tpu_custom_call.1}
  #allocation0 [shape = 'u32[]', space=smem, size = 0x4, offset = 0x4, fixed_abs, tag = 'smem constant byte address 0x4 - core index']
  #allocation1 [shape = 'u32[144,128]{1,0:T(1,128)}', space=vmem, size = 0x12000, scoped, tag = 'internal scratch']
  %s0 = inlined_call_operand.hbm [shape: f32[8,128], index: 0, kind: input, shape index: {}]
  %s1 = inlined_call_operand.hbm [shape: f32[6,128,128], index: 1, kind: input, shape index: {}]
  %s2 = inlined_call_operand.hbm [shape: f32[8,128], index: 2, kind: input, shape index: {}]
  %s3 = inlined_call_operand.hbm [shape: f32[8,128], index: 3, kind: output, shape index: {}]
  %s4 = sld [smem:[#allocation0]]
  $region34: #{tpu_custom_call.1} parent=0
    _
  %s6 = ssub.s32 1, %s4
  %s7 = scalar_select 0, %s6, %s4
  $region1: #{tpu_custom_call.1} parent=0
    #allocation2 [shape = 'u8[4096]{0}', space=vmem, size = 0x1000, scoped, tag = 'input window, operand 0, single buffered']
    #allocation3 [shape = 's32[1]{0}', space=sflag, size = 0x4, scoped, tag = 'scoped memory for tpu_custom_call.1']
    #allocation4 [shape = 's32[1]{0}', space=sflag, size = 0x4, scoped, tag = 'scoped memory for tpu_custom_call.1']
    #allocation5 [shape = 'u8[393216]{0}', space=vmem, size = 0x60000, scoped, tag = 'input window, operand 1, single buffered']
    #allocation6 [shape = 's32[1]{0}', space=sflag, size = 0x4, scoped, tag = 'scoped memory for tpu_custom_call.1']
    #allocation7 [shape = 'u8[4096]{0}', space=vmem, size = 0x1000, scoped, tag = 'input window, operand 2, single buffered']
    #allocation8 [shape = 'u8[4096]{0}', space=vmem, size = 0x1000, scoped, tag = 'output window, operand 0, single buffered']
    %8 = vsyncpa [#allocation3], 0
    %9 = vsyncpa [#allocation6], 0
    %10 = vsyncpa [#allocation4], 0
    // Predicated region
    $region2: #{tpu_custom_call.1} parent=1 // pred_check
      _
    $region3: #{tpu_custom_call.1} parent=1 // pred_check_branch
      %12 = sbr.rel (0) target = $region5
    $region4: #{tpu_custom_call.1} parent=1 // pred_region
      %s14 = ssub.s32 128, 128
      %15 = vsyncadd [#allocation3], %s14
      %s17 = sshll.u32 [#allocation2], 4
      %s18 = int_to_ptr.vmem [resolvable:$true] %s17
      %20 = dma.hbm_to_vmem [thread:$0]  %s0, 128, %s18, [#allocation3]
    $region5: #{tpu_custom_call.1} parent=1 // pred_fallthru
      _
    // Predicated region
    $region6: #{tpu_custom_call.1} parent=1 // pred_check
      _
    $region7: #{tpu_custom_call.1} parent=1 // pred_check_branch
      %22 = sbr.rel (0) target = $region9
    $region8: #{tpu_custom_call.1} parent=1 // pred_region
      %s24 = ssub.s32 12288, 12288
      %25 = vsyncadd [#allocation6], %s24
      %s26 = sshll.u32 [#allocation5], 4
      %s27 = int_to_ptr.vmem [resolvable:$true] %s26
      %32 = dma.hbm_to_vmem [thread:$0]  %s1, 12288, %s27, [#allocation6], 128, 128, 8
    $region9: #{tpu_custom_call.1} parent=1 // pred_fallthru
      _
    // Predicated region
    $region10: #{tpu_custom_call.1} parent=1 // pred_check
      _
    $region11: #{tpu_custom_call.1} parent=1 // pred_check_branch
      %34 = sbr.rel (0) target = $region13
    $region12: #{tpu_custom_call.1} parent=1 // pred_region
      %s36 = ssub.s32 128, 128
      %37 = vsyncadd [#allocation6], %s36
      %s39 = sshll.u32 [#allocation7], 4
      %s40 = int_to_ptr.vmem [resolvable:$true] %s39
      %42 = dma.hbm_to_vmem [thread:$0]  %s2, 128, %s40, [#allocation6]
    $region13: #{tpu_custom_call.1} parent=1 // pred_fallthru
      _
    // Predicated region
    $region14: #{tpu_custom_call.1} parent=1 // pred_check
      _
    $region15: #{tpu_custom_call.1} parent=1 // pred_check_branch
      %44 = sbr.rel (0) target = $region17
    $region16: #{tpu_custom_call.1} parent=1 // pred_region
      %45 = dma.done [#allocation3], 128
    $region17: #{tpu_custom_call.1} parent=1 // pred_fallthru
      _
    // Predicated region
    $region18: #{tpu_custom_call.1} parent=1 // pred_check
      _
    $region19: #{tpu_custom_call.1} parent=1 // pred_check_branch
      %47 = sbr.rel (0) target = $region21
    $region20: #{tpu_custom_call.1} parent=1 // pred_region
      %48 = dma.done [#allocation6], 12288
    $region21: #{tpu_custom_call.1} parent=1 // pred_fallthru
      _
    // Predicated region
    $region22: #{tpu_custom_call.1} parent=1 // pred_check
      _
    $region23: #{tpu_custom_call.1} parent=1 // pred_check_branch
      %50 = sbr.rel (0) target = $region25
    $region24: #{tpu_custom_call.1} parent=1 // pred_region
      %51 = dma.done [#allocation6], 128
    $region25: #{tpu_custom_call.1} parent=1 // pred_fallthru
      _
    %v52 = vld [vmem:[#allocation2] sm:$0xff]
    %v53 = vld [vmem:[#allocation7] sm:$0xff]
    %v54 = vld [vmem:[#allocation5] sm:$0xff]
    %v55 = vld [vmem:[#allocation5 + $0x8] sm:$0xff]
    %v56 = vld [vmem:[#allocation5 + $0x10] sm:$0xff]
    %v57 = vld [vmem:[#allocation5 + $0x18] sm:$0xff]
    %v58 = vld [vmem:[#allocation5 + $0x20] sm:$0xff]
    %v59 = vld [vmem:[#allocation5 + $0x28] sm:$0xff]
    %v60 = vld [vmem:[#allocation5 + $0x30] sm:$0xff]
    %v61 = vld [vmem:[#allocation5 + $0x38] sm:$0xff]
    %v62 = vld [vmem:[#allocation5 + $0x40] sm:$0xff]
    %v63 = vld [vmem:[#allocation5 + $0x48] sm:$0xff]
    %v64 = vld [vmem:[#allocation5 + $0x50] sm:$0xff]
    %v65 = vld [vmem:[#allocation5 + $0x58] sm:$0xff]
    %v66 = vld [vmem:[#allocation5 + $0x60] sm:$0xff]
    %v67 = vld [vmem:[#allocation5 + $0x68] sm:$0xff]
    %v68 = vld [vmem:[#allocation5 + $0x70] sm:$0xff]
    %v69 = vld [vmem:[#allocation5 + $0x78] sm:$0xff]
    %v70 = vlaneseq
    %v71 = vshrl.u32 %v70, 7
    %v72 = vsub.s32 0, %v71
    %v73 = vrot.slane %v53, %v72
    %74 = vmatprep.subr.mxu0 0.0
    %75 = vmatpush1.msra.mxu0 %v54
    %76 = vmatprep.subr.mxu0 0.0
    %77 = vmatpush1.msra.mxu0 %v55
    %78 = vmatprep.subr.mxu0 0.0
    %79 = vmatpush1.msra.mxu0 %v56
    %80 = vmatprep.subr.mxu0 0.0
    %81 = vmatpush1.msra.mxu0 %v57
    %82 = vmatprep.subr.mxu0 0.0
    %83 = vmatpush1.msra.mxu0 %v58
    %84 = vmatprep.subr.mxu0 0.0
    %85 = vmatpush1.msra.mxu0 %v59
    %86 = vmatprep.subr.mxu0 0.0
    %87 = vmatpush1.msra.mxu0 %v60
    %88 = vmatprep.subr.mxu0 0.0
    %89 = vmatpush1.msra.mxu0 %v61
    %90 = vmatprep.subr.mxu0 0.0
    %91 = vmatpush1.msra.mxu0 %v62
    %92 = vmatprep.subr.mxu0 0.0
    %93 = vmatpush1.msra.mxu0 %v63
    %94 = vmatprep.subr.mxu0 0.0
    %95 = vmatpush1.msra.mxu0 %v64
    %96 = vmatprep.subr.mxu0 0.0
    %97 = vmatpush1.msra.mxu0 %v65
    %98 = vmatprep.subr.mxu0 0.0
    %99 = vmatpush1.msra.mxu0 %v66
    %100 = vmatprep.subr.mxu0 0.0
    %101 = vmatpush1.msra.mxu0 %v67
    %102 = vmatprep.subr.mxu0 0.0
    %103 = vmatpush1.msra.mxu0 %v68
    %104 = vmatprep.subr.mxu0 0.0
    %105 = vmatpush1.msra.mxu0 %v69
    %106 = vmatprep.subr.mxu0 0.0
    %107 = vmatpush1.msra.mxu0 0.0
    %108 = vmatprep.subr.mxu0 0.0
    %109 = vmatpush1.msra.mxu0 0.0
    %110 = vmatprep.subr.mxu0 0.0
    %111 = vmatpush1.msra.mxu0 0.0
    %112 = vmatprep.subr.mxu0 0.0
    %113 = vmatpush1.msra.mxu0 0.0
    %114 = vmatprep.subr.mxu0 0.0
    %115 = vmatpush1.msra.mxu0 0.0
    %116 = vmatprep.subr.mxu0 0.0
    %117 = vmatpush1.msra.mxu0 0.0
    %118 = vmatprep.subr.mxu0 0.0
    %119 = vmatpush1.msra.mxu0 0.0
    %120 = vmatprep.subr.mxu0 0.0
    %121 = vmatpush1.msra.mxu0 0.0
    %122 = vmatprep.subr.mxu0 0.0
    %123 = vmatpush1.msra.mxu0 0.0
    %124 = vmatprep.subr.mxu0 0.0
    %125 = vmatpush1.msra.mxu0 0.0
    %126 = vmatprep.subr.mxu0 0.0
    %127 = vmatpush1.msra.mxu0 0.0
    %128 = vmatprep.subr.mxu0 0.0
    %129 = vmatpush1.msra.mxu0 0.0
    %130 = vmatprep.subr.mxu0 0.0
    %131 = vmatpush1.msra.mxu0 0.0
    %132 = vmatprep.subr.mxu0 0.0
    %133 = vmatpush1.msra.mxu0 0.0
    %134 = vmatprep.subr.mxu0 0.0
    %135 = vmatpush1.msra.mxu0 0.0
    %136 = vmatprep.subr.mxu0 0.0
    %137 = vmatpush1.msra.mxu0 0.0
    %138 = vmatprep.mubr.f32.mxu0 0.0
    %139 = vmatmul.mubr.f32.gmra.mrb[0].mxu0 %v52
    %v140 = vpop.f32.mrb[0].mxu0
    %v141 = vadd.f32 %v73, %v140
    %v142 = vpop.f32.mrb[0].mxu0
    %143 = vdwg.mxu0
    %v144 = vmax.f32 %v141, 0.0
    %s145 = scalar_lea.vmem [#allocation5], 128
    %v146 = vld [vmem:[%s145] sm:$0xff]
    %v147 = vld [vmem:[%s145 + $0x8] sm:$0xff]
    %v148 = vld [vmem:[%s145 + $0x10] sm:$0xff]
    %v149 = vld [vmem:[%s145 + $0x18] sm:$0xff]
    %v150 = vld [vmem:[%s145 + $0x20] sm:$0xff]
    %v151 = vld [vmem:[%s145 + $0x28] sm:$0xff]
    %v152 = vld [vmem:[%s145 + $0x30] sm:$0xff]
    %v153 = vld [vmem:[%s145 + $0x38] sm:$0xff]
    %v154 = vld [vmem:[%s145 + $0x40] sm:$0xff]
    %v155 = vld [vmem:[%s145 + $0x48] sm:$0xff]
    %v156 = vld [vmem:[%s145 + $0x50] sm:$0xff]
    %v157 = vld [vmem:[%s145 + $0x58] sm:$0xff]
    %v158 = vld [vmem:[%s145 + $0x60] sm:$0xff]
    %v159 = vld [vmem:[%s145 + $0x68] sm:$0xff]
    %v160 = vld [vmem:[%s145 + $0x70] sm:$0xff]
    %v161 = vld [vmem:[%s145 + $0x78] sm:$0xff]
    %v162 = vlaneseq
    %v163 = vshrl.u32 %v162, 7
    %v164 = vsub.s32 1, %v163
    %v165 = vrot.slane %v53, %v164
    %166 = vmatprep.subr.mxu0 0.0
    %167 = vmatpush1.msra.mxu0 %v146
    %168 = vmatprep.subr.mxu0 0.0
    %169 = vmatpush1.msra.mxu0 %v147
    %170 = vmatprep.subr.mxu0 0.0
    %171 = vmatpush1.msra.mxu0 %v148
    %172 = vmatprep.subr.mxu0 0.0
    %173 = vmatpush1.msra.mxu0 %v149
    %174 = vmatprep.subr.mxu0 0.0
    %175 = vmatpush1.msra.mxu0 %v150
    %176 = vmatprep.subr.mxu0 0.0
    %177 = vmatpush1.msra.mxu0 %v151
    %178 = vmatprep.subr.mxu0 0.0
    %179 = vmatpush1.msra.mxu0 %v152
    %180 = vmatprep.subr.mxu0 0.0
    %181 = vmatpush1.msra.mxu0 %v153
    %182 = vmatprep.subr.mxu0 0.0
    %183 = vmatpush1.msra.mxu0 %v154
    %184 = vmatprep.subr.mxu0 0.0
    %185 = vmatpush1.msra.mxu0 %v155
    %186 = vmatprep.subr.mxu0 0.0
    %187 = vmatpush1.msra.mxu0 %v156
    %188 = vmatprep.subr.mxu0 0.0
    %189 = vmatpush1.msra.mxu0 %v157
    %190 = vmatprep.subr.mxu0 0.0
    %191 = vmatpush1.msra.mxu0 %v158
    %192 = vmatprep.subr.mxu0 0.0
    %193 = vmatpush1.msra.mxu0 %v159
    %194 = vmatprep.subr.mxu0 0.0
    %195 = vmatpush1.msra.mxu0 %v160
    %196 = vmatprep.subr.mxu0 0.0
    %197 = vmatpush1.msra.mxu0 %v161
    %198 = vmatprep.subr.mxu0 0.0
    %199 = vmatpush1.msra.mxu0 0.0
    %200 = vmatprep.subr.mxu0 0.0
    %201 = vmatpush1.msra.mxu0 0.0
    %202 = vmatprep.subr.mxu0 0.0
    %203 = vmatpush1.msra.mxu0 0.0
    %204 = vmatprep.subr.mxu0 0.0
    %205 = vmatpush1.msra.mxu0 0.0
    %206 = vmatprep.subr.mxu0 0.0
    %207 = vmatpush1.msra.mxu0 0.0
    %208 = vmatprep.subr.mxu0 0.0
    %209 = vmatpush1.msra.mxu0 0.0
    %210 = vmatprep.subr.mxu0 0.0
    %211 = vmatpush1.msra.mxu0 0.0
    %212 = vmatprep.subr.mxu0 0.0
    %213 = vmatpush1.msra.mxu0 0.0
    %214 = vmatprep.subr.mxu0 0.0
    %215 = vmatpush1.msra.mxu0 0.0
    %216 = vmatprep.subr.mxu0 0.0
    %217 = vmatpush1.msra.mxu0 0.0
    %218 = vmatprep.subr.mxu0 0.0
    %219 = vmatpush1.msra.mxu0 0.0
    %220 = vmatprep.subr.mxu0 0.0
    %221 = vmatpush1.msra.mxu0 0.0
    %222 = vmatprep.subr.mxu0 0.0
    %223 = vmatpush1.msra.mxu0 0.0
    %224 = vmatprep.subr.mxu0 0.0
    %225 = vmatpush1.msra.mxu0 0.0
    %226 = vmatprep.subr.mxu0 0.0
    %227 = vmatpush1.msra.mxu0 0.0
    %228 = vmatprep.subr.mxu0 0.0
    %229 = vmatpush1.msra.mxu0 0.0
    %230 = vmatprep.mubr.f32.mxu0 0.0
    %231 = vmatmul.mubr.f32.gmra.mrb[0].mxu0 %v144
    %v232 = vpop.f32.mrb[0].mxu0
    %v233 = vadd.f32 %v165, %v232
    %v234 = vpop.f32.mrb[0].mxu0
    %235 = vdwg.mxu0
    %v236 = vmax.f32 %v233, 0.0
    %s237 = scalar_lea.vmem [#allocation5], 256
    %v238 = vld [vmem:[%s237] sm:$0xff]
    %v239 = vld [vmem:[%s237 + $0x8] sm:$0xff]
    %v240 = vld [vmem:[%s237 + $0x10] sm:$0xff]
    %v241 = vld [vmem:[%s237 + $0x18] sm:$0xff]
    %v242 = vld [vmem:[%s237 + $0x20] sm:$0xff]
    %v243 = vld [vmem:[%s237 + $0x28] sm:$0xff]
    %v244 = vld [vmem:[%s237 + $0x30] sm:$0xff]
    %v245 = vld [vmem:[%s237 + $0x38] sm:$0xff]
    %v246 = vld [vmem:[%s237 + $0x40] sm:$0xff]
    %v247 = vld [vmem:[%s237 + $0x48] sm:$0xff]
    %v248 = vld [vmem:[%s237 + $0x50] sm:$0xff]
    %v249 = vld [vmem:[%s237 + $0x58] sm:$0xff]
    %v250 = vld [vmem:[%s237 + $0x60] sm:$0xff]
    %v251 = vld [vmem:[%s237 + $0x68] sm:$0xff]
    %v252 = vld [vmem:[%s237 + $0x70] sm:$0xff]
    %v253 = vld [vmem:[%s237 + $0x78] sm:$0xff]
    %v254 = vlaneseq
    %v255 = vshrl.u32 %v254, 7
    %v256 = vsub.s32 2, %v255
    %v257 = vrot.slane %v53, %v256
    %258 = vmatprep.subr.mxu0 0.0
    %259 = vmatpush1.msra.mxu0 %v238
    %260 = vmatprep.subr.mxu0 0.0
    %261 = vmatpush1.msra.mxu0 %v239
    %262 = vmatprep.subr.mxu0 0.0
    %263 = vmatpush1.msra.mxu0 %v240
    %264 = vmatprep.subr.mxu0 0.0
    %265 = vmatpush1.msra.mxu0 %v241
    %266 = vmatprep.subr.mxu0 0.0
    %267 = vmatpush1.msra.mxu0 %v242
    %268 = vmatprep.subr.mxu0 0.0
    %269 = vmatpush1.msra.mxu0 %v243
    %270 = vmatprep.subr.mxu0 0.0
    %271 = vmatpush1.msra.mxu0 %v244
    %272 = vmatprep.subr.mxu0 0.0
    %273 = vmatpush1.msra.mxu0 %v245
    %274 = vmatprep.subr.mxu0 0.0
    %275 = vmatpush1.msra.mxu0 %v246
    %276 = vmatprep.subr.mxu0 0.0
    %277 = vmatpush1.msra.mxu0 %v247
    %278 = vmatprep.subr.mxu0 0.0
    %279 = vmatpush1.msra.mxu0 %v248
    %280 = vmatprep.subr.mxu0 0.0
    %281 = vmatpush1.msra.mxu0 %v249
    %282 = vmatprep.subr.mxu0 0.0
    %283 = vmatpush1.msra.mxu0 %v250
    %284 = vmatprep.subr.mxu0 0.0
    %285 = vmatpush1.msra.mxu0 %v251
    %286 = vmatprep.subr.mxu0 0.0
    %287 = vmatpush1.msra.mxu0 %v252
    %288 = vmatprep.subr.mxu0 0.0
    %289 = vmatpush1.msra.mxu0 %v253
    %290 = vmatprep.subr.mxu0 0.0
    %291 = vmatpush1.msra.mxu0 0.0
    %292 = vmatprep.subr.mxu0 0.0
    %293 = vmatpush1.msra.mxu0 0.0
    %294 = vmatprep.subr.mxu0 0.0
    %295 = vmatpush1.msra.mxu0 0.0
    %296 = vmatprep.subr.mxu0 0.0
    %297 = vmatpush1.msra.mxu0 0.0
    %298 = vmatprep.subr.mxu0 0.0
    %299 = vmatpush1.msra.mxu0 0.0
    %300 = vmatprep.subr.mxu0 0.0
    %301 = vmatpush1.msra.mxu0 0.0
    %302 = vmatprep.subr.mxu0 0.0
    %303 = vmatpush1.msra.mxu0 0.0
    %304 = vmatprep.subr.mxu0 0.0
    %305 = vmatpush1.msra.mxu0 0.0
    %306 = vmatprep.subr.mxu0 0.0
    %307 = vmatpush1.msra.mxu0 0.0
    %308 = vmatprep.subr.mxu0 0.0
    %309 = vmatpush1.msra.mxu0 0.0
    %310 = vmatprep.subr.mxu0 0.0
    %311 = vmatpush1.msra.mxu0 0.0
    %312 = vmatprep.subr.mxu0 0.0
    %313 = vmatpush1.msra.mxu0 0.0
    %314 = vmatprep.subr.mxu0 0.0
    %315 = vmatpush1.msra.mxu0 0.0
    %316 = vmatprep.subr.mxu0 0.0
    %317 = vmatpush1.msra.mxu0 0.0
    %318 = vmatprep.subr.mxu0 0.0
    %319 = vmatpush1.msra.mxu0 0.0
    %320 = vmatprep.subr.mxu0 0.0
    %321 = vmatpush1.msra.mxu0 0.0
    %322 = vmatprep.mubr.f32.mxu0 0.0
    %323 = vmatmul.mubr.f32.gmra.mrb[0].mxu0 %v236
    %v324 = vpop.f32.mrb[0].mxu0
    %v325 = vadd.f32 %v257, %v324
    %v326 = vpop.f32.mrb[0].mxu0
    %327 = vdwg.mxu0
    %v328 = vmax.f32 %v325, 0.0
    %s329 = scalar_lea.vmem [#allocation5], 384
    %v330 = vld [vmem:[%s329] sm:$0xff]
    %v331 = vld [vmem:[%s329 + $0x8] sm:$0xff]
    %v332 = vld [vmem:[%s329 + $0x10] sm:$0xff]
    %v333 = vld [vmem:[%s329 + $0x18] sm:$0xff]
    %v334 = vld [vmem:[%s329 + $0x20] sm:$0xff]
    %v335 = vld [vmem:[%s329 + $0x28] sm:$0xff]
    %v336 = vld [vmem:[%s329 + $0x30] sm:$0xff]
    %v337 = vld [vmem:[%s329 + $0x38] sm:$0xff]
    %v338 = vld [vmem:[%s329 + $0x40] sm:$0xff]
    %v339 = vld [vmem:[%s329 + $0x48] sm:$0xff]
    %v340 = vld [vmem:[%s329 + $0x50] sm:$0xff]
    %v341 = vld [vmem:[%s329 + $0x58] sm:$0xff]
    %v342 = vld [vmem:[%s329 + $0x60] sm:$0xff]
    %v343 = vld [vmem:[%s329 + $0x68] sm:$0xff]
    %v344 = vld [vmem:[%s329 + $0x70] sm:$0xff]
    %v345 = vld [vmem:[%s329 + $0x78] sm:$0xff]
    %v346 = vlaneseq
    %v347 = vshrl.u32 %v346, 7
    %v348 = vsub.s32 3, %v347
    %v349 = vrot.slane %v53, %v348
    %350 = vmatprep.subr.mxu0 0.0
    %351 = vmatpush1.msra.mxu0 %v330
    %352 = vmatprep.subr.mxu0 0.0
    %353 = vmatpush1.msra.mxu0 %v331
    %354 = vmatprep.subr.mxu0 0.0
    %355 = vmatpush1.msra.mxu0 %v332
    %356 = vmatprep.subr.mxu0 0.0
    %357 = vmatpush1.msra.mxu0 %v333
    %358 = vmatprep.subr.mxu0 0.0
    %359 = vmatpush1.msra.mxu0 %v334
    %360 = vmatprep.subr.mxu0 0.0
    %361 = vmatpush1.msra.mxu0 %v335
    %362 = vmatprep.subr.mxu0 0.0
    %363 = vmatpush1.msra.mxu0 %v336
    %364 = vmatprep.subr.mxu0 0.0
    %365 = vmatpush1.msra.mxu0 %v337
    %366 = vmatprep.subr.mxu0 0.0
    %367 = vmatpush1.msra.mxu0 %v338
    %368 = vmatprep.subr.mxu0 0.0
    %369 = vmatpush1.msra.mxu0 %v339
    %370 = vmatprep.subr.mxu0 0.0
    %371 = vmatpush1.msra.mxu0 %v340
    %372 = vmatprep.subr.mxu0 0.0
    %373 = vmatpush1.msra.mxu0 %v341
    %374 = vmatprep.subr.mxu0 0.0
    %375 = vmatpush1.msra.mxu0 %v342
    %376 = vmatprep.subr.mxu0 0.0
    %377 = vmatpush1.msra.mxu0 %v343
    %378 = vmatprep.subr.mxu0 0.0
    %379 = vmatpush1.msra.mxu0 %v344
    %380 = vmatprep.subr.mxu0 0.0
    %381 = vmatpush1.msra.mxu0 %v345
    %382 = vmatprep.subr.mxu0 0.0
    %383 = vmatpush1.msra.mxu0 0.0
    %384 = vmatprep.subr.mxu0 0.0
    %385 = vmatpush1.msra.mxu0 0.0
    %386 = vmatprep.subr.mxu0 0.0
    %387 = vmatpush1.msra.mxu0 0.0
    %388 = vmatprep.subr.mxu0 0.0
    %389 = vmatpush1.msra.mxu0 0.0
    %390 = vmatprep.subr.mxu0 0.0
    %391 = vmatpush1.msra.mxu0 0.0
    %392 = vmatprep.subr.mxu0 0.0
    %393 = vmatpush1.msra.mxu0 0.0
    %394 = vmatprep.subr.mxu0 0.0
    %395 = vmatpush1.msra.mxu0 0.0
    %396 = vmatprep.subr.mxu0 0.0
    %397 = vmatpush1.msra.mxu0 0.0
    %398 = vmatprep.subr.mxu0 0.0
    %399 = vmatpush1.msra.mxu0 0.0
    %400 = vmatprep.subr.mxu0 0.0
    %401 = vmatpush1.msra.mxu0 0.0
    %402 = vmatprep.subr.mxu0 0.0
    %403 = vmatpush1.msra.mxu0 0.0
    %404 = vmatprep.subr.mxu0 0.0
    %405 = vmatpush1.msra.mxu0 0.0
    %406 = vmatprep.subr.mxu0 0.0
    %407 = vmatpush1.msra.mxu0 0.0
    %408 = vmatprep.subr.mxu0 0.0
    %409 = vmatpush1.msra.mxu0 0.0
    %410 = vmatprep.subr.mxu0 0.0
    %411 = vmatpush1.msra.mxu0 0.0
    %412 = vmatprep.subr.mxu0 0.0
    %413 = vmatpush1.msra.mxu0 0.0
    %414 = vmatprep.mubr.f32.mxu0 0.0
    %415 = vmatmul.mubr.f32.gmra.mrb[0].mxu0 %v328
    %v416 = vpop.f32.mrb[0].mxu0
    %v417 = vadd.f32 %v349, %v416
    %v418 = vpop.f32.mrb[0].mxu0
    %419 = vdwg.mxu0
    %v420 = vmax.f32 %v417, 0.0
    %s421 = scalar_lea.vmem [#allocation5], 512
    %v422 = vld [vmem:[%s421] sm:$0xff]
    %v423 = vld [vmem:[%s421 + $0x8] sm:$0xff]
    %v424 = vld [vmem:[%s421 + $0x10] sm:$0xff]
    %v425 = vld [vmem:[%s421 + $0x18] sm:$0xff]
    %v426 = vld [vmem:[%s421 + $0x20] sm:$0xff]
    %v427 = vld [vmem:[%s421 + $0x28] sm:$0xff]
    %v428 = vld [vmem:[%s421 + $0x30] sm:$0xff]
    %v429 = vld [vmem:[%s421 + $0x38] sm:$0xff]
    %v430 = vld [vmem:[%s421 + $0x40] sm:$0xff]
    %v431 = vld [vmem:[%s421 + $0x48] sm:$0xff]
    %v432 = vld [vmem:[%s421 + $0x50] sm:$0xff]
    %v433 = vld [vmem:[%s421 + $0x58] sm:$0xff]
    %v434 = vld [vmem:[%s421 + $0x60] sm:$0xff]
    %v435 = vld [vmem:[%s421 + $0x68] sm:$0xff]
    %v436 = vld [vmem:[%s421 + $0x70] sm:$0xff]
    %v437 = vld [vmem:[%s421 + $0x78] sm:$0xff]
    %v438 = vlaneseq
    %v439 = vshrl.u32 %v438, 7
    %v440 = vsub.s32 4, %v439
    %v441 = vrot.slane %v53, %v440
    %442 = vmatprep.subr.mxu0 0.0
    %443 = vmatpush1.msra.mxu0 %v422
    %444 = vmatprep.subr.mxu0 0.0
    %445 = vmatpush1.msra.mxu0 %v423
    %446 = vmatprep.subr.mxu0 0.0
    %447 = vmatpush1.msra.mxu0 %v424
    %448 = vmatprep.subr.mxu0 0.0
    %449 = vmatpush1.msra.mxu0 %v425
    %450 = vmatprep.subr.mxu0 0.0
    %451 = vmatpush1.msra.mxu0 %v426
    %452 = vmatprep.subr.mxu0 0.0
    %453 = vmatpush1.msra.mxu0 %v427
    %454 = vmatprep.subr.mxu0 0.0
    %455 = vmatpush1.msra.mxu0 %v428
    %456 = vmatprep.subr.mxu0 0.0
    %457 = vmatpush1.msra.mxu0 %v429
    %458 = vmatprep.subr.mxu0 0.0
    %459 = vmatpush1.msra.mxu0 %v430
    %460 = vmatprep.subr.mxu0 0.0
    %461 = vmatpush1.msra.mxu0 %v431
    %462 = vmatprep.subr.mxu0 0.0
    %463 = vmatpush1.msra.mxu0 %v432
    %464 = vmatprep.subr.mxu0 0.0
    %465 = vmatpush1.msra.mxu0 %v433
    %466 = vmatprep.subr.mxu0 0.0
    %467 = vmatpush1.msra.mxu0 %v434
    %468 = vmatprep.subr.mxu0 0.0
    %469 = vmatpush1.msra.mxu0 %v435
    %470 = vmatprep.subr.mxu0 0.0
    %471 = vmatpush1.msra.mxu0 %v436
    %472 = vmatprep.subr.mxu0 0.0
    %473 = vmatpush1.msra.mxu0 %v437
    %474 = vmatprep.subr.mxu0 0.0
    %475 = vmatpush1.msra.mxu0 0.0
    %476 = vmatprep.subr.mxu0 0.0
    %477 = vmatpush1.msra.mxu0 0.0
    %478 = vmatprep.subr.mxu0 0.0
    %479 = vmatpush1.msra.mxu0 0.0
    %480 = vmatprep.subr.mxu0 0.0
    %481 = vmatpush1.msra.mxu0 0.0
    %482 = vmatprep.subr.mxu0 0.0
    %483 = vmatpush1.msra.mxu0 0.0
    %484 = vmatprep.subr.mxu0 0.0
    %485 = vmatpush1.msra.mxu0 0.0
    %486 = vmatprep.subr.mxu0 0.0
    %487 = vmatpush1.msra.mxu0 0.0
    %488 = vmatprep.subr.mxu0 0.0
    %489 = vmatpush1.msra.mxu0 0.0
    %490 = vmatprep.subr.mxu0 0.0
    %491 = vmatpush1.msra.mxu0 0.0
    %492 = vmatprep.subr.mxu0 0.0
    %493 = vmatpush1.msra.mxu0 0.0
    %494 = vmatprep.subr.mxu0 0.0
    %495 = vmatpush1.msra.mxu0 0.0
    %496 = vmatprep.subr.mxu0 0.0
    %497 = vmatpush1.msra.mxu0 0.0
    %498 = vmatprep.subr.mxu0 0.0
    %499 = vmatpush1.msra.mxu0 0.0
    %500 = vmatprep.subr.mxu0 0.0
    %501 = vmatpush1.msra.mxu0 0.0
    %502 = vmatprep.subr.mxu0 0.0
    %503 = vmatpush1.msra.mxu0 0.0
    %504 = vmatprep.subr.mxu0 0.0
    %505 = vmatpush1.msra.mxu0 0.0
    %506 = vmatprep.mubr.f32.mxu0 0.0
    %507 = vmatmul.mubr.f32.gmra.mrb[0].mxu0 %v420
    %v508 = vpop.f32.mrb[0].mxu0
    %v509 = vadd.f32 %v441, %v508
    %v510 = vpop.f32.mrb[0].mxu0
    %511 = vdwg.mxu0
    %v512 = vmax.f32 %v509, 0.0
    %s513 = scalar_lea.vmem [#allocation5], 640
    %v514 = vld [vmem:[%s513] sm:$0xff]
    %v515 = vld [vmem:[%s513 + $0x8] sm:$0xff]
    %v516 = vld [vmem:[%s513 + $0x10] sm:$0xff]
    %v517 = vld [vmem:[%s513 + $0x18] sm:$0xff]
    %v518 = vld [vmem:[%s513 + $0x20] sm:$0xff]
    %v519 = vld [vmem:[%s513 + $0x28] sm:$0xff]
    %v520 = vld [vmem:[%s513 + $0x30] sm:$0xff]
    %v521 = vld [vmem:[%s513 + $0x38] sm:$0xff]
    %v522 = vld [vmem:[%s513 + $0x40] sm:$0xff]
    %v523 = vld [vmem:[%s513 + $0x48] sm:$0xff]
    %v524 = vld [vmem:[%s513 + $0x50] sm:$0xff]
    %v525 = vld [vmem:[%s513 + $0x58] sm:$0xff]
    %v526 = vld [vmem:[%s513 + $0x60] sm:$0xff]
    %v527 = vld [vmem:[%s513 + $0x68] sm:$0xff]
    %v528 = vld [vmem:[%s513 + $0x70] sm:$0xff]
    %v529 = vld [vmem:[%s513 + $0x78] sm:$0xff]
    %v530 = vlaneseq
    %v531 = vshrl.u32 %v530, 7
    %v532 = vsub.s32 5, %v531
    %v533 = vrot.slane %v53, %v532
    %534 = vmatprep.subr.mxu0 0.0
    %535 = vmatpush1.msra.mxu0 %v514
    %536 = vmatprep.subr.mxu0 0.0
    %537 = vmatpush1.msra.mxu0 %v515
    %538 = vmatprep.subr.mxu0 0.0
    %539 = vmatpush1.msra.mxu0 %v516
    %540 = vmatprep.subr.mxu0 0.0
    %541 = vmatpush1.msra.mxu0 %v517
    %542 = vmatprep.subr.mxu0 0.0
    %543 = vmatpush1.msra.mxu0 %v518
    %544 = vmatprep.subr.mxu0 0.0
    %545 = vmatpush1.msra.mxu0 %v519
    %546 = vmatprep.subr.mxu0 0.0
    %547 = vmatpush1.msra.mxu0 %v520
    %548 = vmatprep.subr.mxu0 0.0
    %549 = vmatpush1.msra.mxu0 %v521
    %550 = vmatprep.subr.mxu0 0.0
    %551 = vmatpush1.msra.mxu0 %v522
    %552 = vmatprep.subr.mxu0 0.0
    %553 = vmatpush1.msra.mxu0 %v523
    %554 = vmatprep.subr.mxu0 0.0
    %555 = vmatpush1.msra.mxu0 %v524
    %556 = vmatprep.subr.mxu0 0.0
    %557 = vmatpush1.msra.mxu0 %v525
    %558 = vmatprep.subr.mxu0 0.0
    %559 = vmatpush1.msra.mxu0 %v526
    %560 = vmatprep.subr.mxu0 0.0
    %561 = vmatpush1.msra.mxu0 %v527
    %562 = vmatprep.subr.mxu0 0.0
    %563 = vmatpush1.msra.mxu0 %v528
    %564 = vmatprep.subr.mxu0 0.0
    %565 = vmatpush1.msra.mxu0 %v529
    %566 = vmatprep.subr.mxu0 0.0
    %567 = vmatpush1.msra.mxu0 0.0
    %568 = vmatprep.subr.mxu0 0.0
    %569 = vmatpush1.msra.mxu0 0.0
    %570 = vmatprep.subr.mxu0 0.0
    %571 = vmatpush1.msra.mxu0 0.0
    %572 = vmatprep.subr.mxu0 0.0
    %573 = vmatpush1.msra.mxu0 0.0
    %574 = vmatprep.subr.mxu0 0.0
    %575 = vmatpush1.msra.mxu0 0.0
    %576 = vmatprep.subr.mxu0 0.0
    %577 = vmatpush1.msra.mxu0 0.0
    %578 = vmatprep.subr.mxu0 0.0
    %579 = vmatpush1.msra.mxu0 0.0
    %580 = vmatprep.subr.mxu0 0.0
    %581 = vmatpush1.msra.mxu0 0.0
    %582 = vmatprep.subr.mxu0 0.0
    %583 = vmatpush1.msra.mxu0 0.0
    %584 = vmatprep.subr.mxu0 0.0
    %585 = vmatpush1.msra.mxu0 0.0
    %586 = vmatprep.subr.mxu0 0.0
    %587 = vmatpush1.msra.mxu0 0.0
    %588 = vmatprep.subr.mxu0 0.0
    %589 = vmatpush1.msra.mxu0 0.0
    %590 = vmatprep.subr.mxu0 0.0
    %591 = vmatpush1.msra.mxu0 0.0
    %592 = vmatprep.subr.mxu0 0.0
    %593 = vmatpush1.msra.mxu0 0.0
    %594 = vmatprep.subr.mxu0 0.0
    %595 = vmatpush1.msra.mxu0 0.0
    %596 = vmatprep.subr.mxu0 0.0
    %597 = vmatpush1.msra.mxu0 0.0
    %598 = vmatprep.mubr.f32.mxu0 0.0
    %599 = vmatmul.mubr.f32.gmra.mrb[0].mxu0 %v512
    %v600 = vpop.f32.mrb[0].mxu0
    %v601 = vadd.f32 %v533, %v600
    %v602 = vpop.f32.mrb[0].mxu0
    %603 = vdwg.mxu0
    %604 = vst [vmem:[#allocation8] sm:$0xff] %v601
    // Predicated region
    $region26: #{tpu_custom_call.1} parent=1 // pred_check
      _
    $region27: #{tpu_custom_call.1} parent=1 // pred_check_branch
      %606 = sbr.rel (0) target = $region29
    $region28: #{tpu_custom_call.1} parent=1 // pred_region
      %s608 = ssub.s32 128, 128
      %609 = vsyncadd [#allocation4], %s608
      %s611 = sshll.u32 [#allocation8], 4
      %s612 = int_to_ptr.vmem [resolvable:$true] %s611
      %614 = dma.vmem_to_hbm [thread:$0]  %s612, 128, %s3, [#allocation4]
    $region29: #{tpu_custom_call.1} parent=1 // pred_fallthru
      _
    // Predicated region
    $region30: #{tpu_custom_call.1} parent=1 // pred_check
      _
    $region31: #{tpu_custom_call.1} parent=1 // pred_check_branch
      %616 = sbr.rel (0) target = $region33
    $region32: #{tpu_custom_call.1} parent=1 // pred_region
      %617 = dma.done [#allocation4], 128
    $region33: #{tpu_custom_call.1} parent=1 // pred_fallthru
      _
    %618 = vsyncpa [#allocation3], 1
    %619 = vsyncpa [#allocation6], 1
    %620 = vsyncpa [#allocation4], 1

</llo_original>
